<compile_context>
chip_gen: v7x
topology: tpu7x:2x2x1
jax: 0.10.0
libtpu: 0.0.40
codegen_flags: <defaults>
</compile_context>

<pallas_src>
import functools

import jax
import jax.numpy as jnp
from jax import lax
from jax.experimental import pallas as pl
from jax.experimental.pallas import tpu as pltpu


def _bow_kernel(ids_ref, emb_ref, w_ref, b_ref, out_ref, *, bf16_matmul):
    # ids_ref : (TB, S)        int32  VMEM  (this batch tile's token ids)
    # emb_ref : (V_pad, E_pad) f32    VMEM  (whole table, single-buffered)
    # w_ref   : (E_pad, O_pad) f32    VMEM  (Linear weight, transposed)
    # b_ref   : (1, O_pad)     f32    VMEM
    # out_ref : (TB, O_pad)    f32    VMEM
    tb, s_len = ids_ref.shape
    v_pad = emb_ref.shape[0]

    ids = ids_ref[...]                                       # (TB, S) int32
    vocab_iota = lax.broadcasted_iota(jnp.int32, (tb, v_pad), 1)

    # counts[b, v] = #{s : ids[b, s] == v}.  Pure VPU compares/adds; the
    # bag-of-words reduction itself then runs on the otherwise-idle MXU.
    counts = jnp.zeros((tb, v_pad), jnp.float32)
    for s in range(s_len):                 # static, small S; vectorized over V
        counts = counts + (ids[:, s:s + 1] == vocab_iota).astype(jnp.float32)

    emb = emb_ref[...]
    w = w_ref[...]
    if bf16_matmul:
        counts = counts.astype(jnp.bfloat16)   # small integers: exact in bf16
        emb = emb.astype(jnp.bfloat16)
        w = w.astype(jnp.bfloat16)

    bow = jnp.dot(counts, emb, preferred_element_type=jnp.float32)
    bow = bow * jnp.float32(1.0 / s_len)       # hoisted mean scaling (1 VPU op)
    if bf16_matmul:
        bow = bow.astype(jnp.bfloat16)

    out_ref[...] = (
        jnp.dot(bow, w, preferred_element_type=jnp.float32) + b_ref[...]
    )


def bow_classifier(sentence, emb, w, b, *, tile_b=256, bf16_matmul=False):
    """sentence: (B, S) int32; emb: (V, E) f32; w: (O, E) f32 (PyTorch layout);
    b: (O,) f32.  Returns (B, O) f32, matching BowClassifier.forward."""
    B, S = sentence.shape
    V, E = emb.shape
    O = w.shape[0]

    # TPU-friendly padding: lane dims to 128 (E, O), vocab to 128 rows.
    e_pad = pl.cdiv(E, 128) * 128
    o_pad = pl.cdiv(O, 128) * 128
    v_pad = pl.cdiv(V, 128) * 128

    # Adaptive batch tile: as big as the padded batch allows (up to tile_b),
    # but prefer >=2 grid steps so v7x's two TensorCores both get work.
    b_ceil8 = pl.cdiv(B, 8) * 8
    tile_b = max(8, min(tile_b, b_ceil8))
    if b_ceil8 // tile_b < 2 and b_ceil8 >= 16:
        tile_b = pl.cdiv(b_ceil8 // 2, 8) * 8
    b_pad = pl.cdiv(B, tile_b) * tile_b

    # Zero padding is value-preserving: padded vocab rows / E cols / O cols
    # contribute exactly zero; padded batch rows are sliced off below.
    ids_p = jnp.zeros((b_pad, S), jnp.int32).at[:B].set(sentence.astype(jnp.int32))
    emb_p = jnp.zeros((v_pad, e_pad), jnp.float32).at[:V, :E].set(emb)
    w_p = jnp.zeros((e_pad, o_pad), jnp.float32).at[:E, :O].set(w.T)
    bias_p = jnp.zeros((1, o_pad), jnp.float32).at[0, :O].set(b)

    # VMEM budget: single-buffered invariants + double-buffered per-tile ids
    # and output blocks + in-kernel counts/bow temporaries, with 2x headroom.
    invariant_bytes = 4 * (v_pad * e_pad + e_pad * o_pad + o_pad)
    tile_bytes = 2 * 4 * (tile_b * S + tile_b * o_pad)
    temp_bytes = 4 * tile_b * (v_pad + e_pad)
    vmem_limit = int(min(max(2 * (invariant_bytes + tile_bytes + temp_bytes),
                             16 * 1024 * 1024),
                         64 * 1024 * 1024))

    resident = pl.BlockSpec(memory_space=pltpu.MemorySpace.VMEM)
    grid = (b_pad // tile_b,)

    out = pl.pallas_call(
        functools.partial(_bow_kernel, bf16_matmul=bf16_matmul),
        out_shape=jax.ShapeDtypeStruct((b_pad, o_pad), jnp.float32),
        grid_spec=pltpu.PrefetchScalarGridSpec(
            num_scalar_prefetch=0,
            grid=grid,
            in_specs=[
                pl.BlockSpec((tile_b, S), lambda i: (i, 0)),  # token ids tile
                resident,                                     # embedding table
                resident,                                     # W^T
                resident,                                     # bias
            ],
            out_specs=pl.BlockSpec((tile_b, o_pad), lambda i: (i, 0)),
        ),
        compiler_params=pltpu.CompilerParams(
            dimension_semantics=("parallel",),   # batch tiles -> both TCs on v7x
            vmem_limit_bytes=vmem_limit,
        ),
    )(ids_p, emb_p, w_p, bias_p)

    return out[:B, :O]


if __name__ == "__main__":
    # Small, module-consistent shapes.
    B = 2          # batch
    S = 8          # sequence length
    V = 64         # num_words (vocab)
    E = 32         # embedding_dim
    O = 50         # Linear output dim (fixed by the module)

    key = jax.random.PRNGKey(0)
    k_ids, k_emb, k_w, k_b = jax.random.split(key, 4)

    # nn.Embedding ~ N(0,1); nn.Linear ~ U(-1/sqrt(E), 1/sqrt(E)).
    sentence = jax.random.randint(k_ids, (B, S), 0, V, dtype=jnp.int32)
    emb = jax.random.normal(k_emb, (V, E), dtype=jnp.float32)
    bound = 1.0 / (E ** 0.5)
    w = jax.random.uniform(k_w, (O, E), minval=-bound, maxval=bound,
                           dtype=jnp.float32)          # PyTorch layout (O, E)
    b = jax.random.uniform(k_b, (O,), minval=-bound, maxval=bound,
                           dtype=jnp.float32)

    out = bow_classifier(sentence, emb, w, b)
    jax.block_until_ready(out)

    # Reference check in plain JAX.
    ref = jnp.mean(emb[sentence], axis=1) @ w.T + b
    assert out.shape == (B, O)
    assert jnp.allclose(out, ref, atol=1e-4, rtol=1e-4)

    print("KERNEL_OK")
</pallas_src>

<mosaic_0001>
module attributes {stable_mosaic.version = 11 : i64} {
  func.func @_bow_kernel(%arg0: i32, %arg1: memref<8x8xi32, #tpu.memory_space<vmem>>, %arg2: memref<128x128xf32, #tpu.memory_space<vmem>>, %arg3: memref<128x128xf32, #tpu.memory_space<vmem>>, %arg4: memref<1x128xf32, #tpu.memory_space<vmem>>, %arg5: memref<8x128xf32, #tpu.memory_space<vmem>>) attributes {dimension_semantics = [#tpu.dimension_semantics<parallel>], iteration_bounds = array<i64: 1>, scalar_prefetch = 0 : i64, scratch_operands = 0 : i64, tpu.core_type = #tpu.core_type<tc>, window_params = [{transform_indices = @transform_0, window_bounds = array<i64: 8, 8>}, {pipeline_mode = #tpu.pipeline_mode<synchronous>, transform_indices = @transform_1, window_bounds = array<i64: 128, 128>}, {pipeline_mode = #tpu.pipeline_mode<synchronous>, transform_indices = @transform_2, window_bounds = array<i64: 128, 128>}, {pipeline_mode = #tpu.pipeline_mode<synchronous>, transform_indices = @transform_3, window_bounds = array<i64: 1, 128>}, {transform_indices = @transform_4, window_bounds = array<i64: 8, 128>}]} {
    %c0 = arith.constant 0 : index
    %c0_0 = arith.constant 0 : index
    %0 = vector.load %arg1[%c0, %c0_0] : memref<8x8xi32, #tpu.memory_space<vmem>>, vector<8x8xi32>
    %1 = tpu.iota {dimensions = array<i32: 1>} : vector<8x128xi32>
    %cst = arith.constant 0.000000e+00 : f32
    %2 = vector.broadcast %cst : f32 to vector<8x128xf32>
    %3 = vector.extract_strided_slice %0 {offsets = [0, 0], sizes = [8, 1], strides = [1, 1]} : vector<8x8xi32> to vector<8x1xi32>
    %4 = vector.broadcast %3 : vector<8x1xi32> to vector<8x128xi32>
    %5 = arith.cmpi eq, %4, %1 : vector<8x128xi32>
    %6 = arith.extui %5 : vector<8x128xi1> to vector<8x128xi32>
    %7 = arith.sitofp %6 : vector<8x128xi32> to vector<8x128xf32>
    %8 = arith.addf %2, %7 : vector<8x128xf32>
    %9 = vector.extract_strided_slice %0 {offsets = [0, 1], sizes = [8, 1], strides = [1, 1]} : vector<8x8xi32> to vector<8x1xi32>
    %10 = vector.broadcast %9 : vector<8x1xi32> to vector<8x128xi32>
    %11 = arith.cmpi eq, %10, %1 : vector<8x128xi32>
    %12 = arith.extui %11 : vector<8x128xi1> to vector<8x128xi32>
    %13 = arith.sitofp %12 : vector<8x128xi32> to vector<8x128xf32>
    %14 = arith.addf %8, %13 : vector<8x128xf32>
    %15 = vector.extract_strided_slice %0 {offsets = [0, 2], sizes = [8, 1], strides = [1, 1]} : vector<8x8xi32> to vector<8x1xi32>
    %16 = vector.broadcast %15 : vector<8x1xi32> to vector<8x128xi32>
    %17 = arith.cmpi eq, %16, %1 : vector<8x128xi32>
    %18 = arith.extui %17 : vector<8x128xi1> to vector<8x128xi32>
    %19 = arith.sitofp %18 : vector<8x128xi32> to vector<8x128xf32>
    %20 = arith.addf %14, %19 : vector<8x128xf32>
    %21 = vector.extract_strided_slice %0 {offsets = [0, 3], sizes = [8, 1], strides = [1, 1]} : vector<8x8xi32> to vector<8x1xi32>
    %22 = vector.broadcast %21 : vector<8x1xi32> to vector<8x128xi32>
    %23 = arith.cmpi eq, %22, %1 : vector<8x128xi32>
    %24 = arith.extui %23 : vector<8x128xi1> to vector<8x128xi32>
    %25 = arith.sitofp %24 : vector<8x128xi32> to vector<8x128xf32>
    %26 = arith.addf %20, %25 : vector<8x128xf32>
    %27 = vector.extract_strided_slice %0 {offsets = [0, 4], sizes = [8, 1], strides = [1, 1]} : vector<8x8xi32> to vector<8x1xi32>
    %28 = vector.broadcast %27 : vector<8x1xi32> to vector<8x128xi32>
    %29 = arith.cmpi eq, %28, %1 : vector<8x128xi32>
    %30 = arith.extui %29 : vector<8x128xi1> to vector<8x128xi32>
    %31 = arith.sitofp %30 : vector<8x128xi32> to vector<8x128xf32>
    %32 = arith.addf %26, %31 : vector<8x128xf32>
    %33 = vector.extract_strided_slice %0 {offsets = [0, 5], sizes = [8, 1], strides = [1, 1]} : vector<8x8xi32> to vector<8x1xi32>
    %34 = vector.broadcast %33 : vector<8x1xi32> to vector<8x128xi32>
    %35 = arith.cmpi eq, %34, %1 : vector<8x128xi32>
    %36 = arith.extui %35 : vector<8x128xi1> to vector<8x128xi32>
    %37 = arith.sitofp %36 : vector<8x128xi32> to vector<8x128xf32>
    %38 = arith.addf %32, %37 : vector<8x128xf32>
    %39 = vector.extract_strided_slice %0 {offsets = [0, 6], sizes = [8, 1], strides = [1, 1]} : vector<8x8xi32> to vector<8x1xi32>
    %40 = vector.broadcast %39 : vector<8x1xi32> to vector<8x128xi32>
    %41 = arith.cmpi eq, %40, %1 : vector<8x128xi32>
    %42 = arith.extui %41 : vector<8x128xi1> to vector<8x128xi32>
    %43 = arith.sitofp %42 : vector<8x128xi32> to vector<8x128xf32>
    %44 = arith.addf %38, %43 : vector<8x128xf32>
    %45 = vector.extract_strided_slice %0 {offsets = [0, 7], sizes = [8, 1], strides = [1, 1]} : vector<8x8xi32> to vector<8x1xi32>
    %46 = vector.broadcast %45 : vector<8x1xi32> to vector<8x128xi32>
    %47 = arith.cmpi eq, %46, %1 : vector<8x128xi32>
    %48 = arith.extui %47 : vector<8x128xi1> to vector<8x128xi32>
    %49 = arith.sitofp %48 : vector<8x128xi32> to vector<8x128xf32>
    %50 = arith.addf %44, %49 : vector<8x128xf32>
    %c0_1 = arith.constant 0 : index
    %c0_2 = arith.constant 0 : index
    %51 = vector.load %arg2[%c0_1, %c0_2] : memref<128x128xf32, #tpu.memory_space<vmem>>, vector<128x128xf32>
    %c0_3 = arith.constant 0 : index
    %c0_4 = arith.constant 0 : index
    %52 = vector.load %arg3[%c0_3, %c0_4] : memref<128x128xf32, #tpu.memory_space<vmem>>, vector<128x128xf32>
    %cst_5 = arith.constant dense<0.000000e+00> : vector<8x128xf32>
    %53 = tpu.matmul %50, %51, %cst_5 {dimension_numbers = #tpu.dot_dimension_numbers<[1], [0], [0], [1], [0, 0, 1, 1], [], []>} : vector<8x128xf32>, vector<128x128xf32>, vector<8x128xf32> -> vector<8x128xf32>
    %cst_6 = arith.constant 1.250000e-01 : f32
    %54 = vector.broadcast %cst_6 : f32 to vector<8x128xf32>
    %55 = arith.mulf %53, %54 : vector<8x128xf32>
    %cst_7 = arith.constant dense<0.000000e+00> : vector<8x128xf32>
    %56 = tpu.matmul %55, %52, %cst_7 {dimension_numbers = #tpu.dot_dimension_numbers<[1], [0], [0], [1], [0, 0, 1, 1], [], []>} : vector<8x128xf32>, vector<128x128xf32>, vector<8x128xf32> -> vector<8x128xf32>
    %c0_8 = arith.constant 0 : index
    %c0_9 = arith.constant 0 : index
    %57 = vector.load %arg4[%c0_8, %c0_9] : memref<1x128xf32, #tpu.memory_space<vmem>>, vector<1x128xf32>
    %58 = vector.broadcast %57 : vector<1x128xf32> to vector<8x128xf32>
    %59 = arith.addf %56, %58 : vector<8x128xf32>
    %c0_10 = arith.constant 0 : index
    %c0_11 = arith.constant 0 : index
    %60 = vector.load %arg5[%c0_10, %c0_11] : memref<8x128xf32, #tpu.memory_space<vmem>>, vector<8x128xf32>
    tpu.vector_store %arg5[%c0_10, %c0_11], %59 {strides = array<i32>} : memref<8x128xf32, #tpu.memory_space<vmem>>, vector<8x128xf32>,
    return
  }
  func.func @transform_0(%arg0: i32) -> (i32, i32) {
    %c0_i32 = arith.constant 0 : i32
    %c0_i32_0 = arith.constant 0 : i32
    return %arg0, %c0_i32 : i32, i32
  }
  func.func @transform_1(%arg0: i32) -> (i32, i32) {
    %c0_i32 = arith.constant 0 : i32
    %c0_i32_0 = arith.constant 0 : i32
    %c0_i32_1 = arith.constant 0 : i32
    return %c0_i32, %c0_i32_0 : i32, i32
  }
  func.func @transform_2(%arg0: i32) -> (i32, i32) {
    %c0_i32 = arith.constant 0 : i32
    %c0_i32_0 = arith.constant 0 : i32
    %c0_i32_1 = arith.constant 0 : i32
    return %c0_i32, %c0_i32_0 : i32, i32
  }
  func.func @transform_3(%arg0: i32) -> (i32, i32) {
    %c0_i32 = arith.constant 0 : i32
    %c0_i32_0 = arith.constant 0 : i32
    %c0_i32_1 = arith.constant 0 : i32
    return %c0_i32, %c0_i32_0 : i32, i32
  }
  func.func @transform_4(%arg0: i32) -> (i32, i32) {
    %c0_i32 = arith.constant 0 : i32
    %c0_i32_0 = arith.constant 0 : i32
    return %arg0, %c0_i32 : i32, i32
  }
}

</mosaic_0001>

<llo_original>
// kernel: tpu_custom_call.1
$region0: #{tpu_custom_call.1}
  #allocation0 [shape = 'u32[]', space=smem, size = 0x4, offset = 0x4, fixed_abs, tag = 'smem constant byte address 0x4 - core index']
  #allocation1 [shape = 'u32[144,128]{1,0:T(1,128)}', space=vmem, size = 0x12000, scoped, tag = 'internal scratch']
  %s0 = inlined_call_operand.hbm [shape: s32[8,8], index: 0, kind: input, shape index: {}]
  %s1 = inlined_call_operand.hbm [shape: f32[128,128], index: 1, kind: input, shape index: {}]
  %s2 = inlined_call_operand.hbm [shape: f32[128,128], index: 2, kind: input, shape index: {}]
  %s3 = inlined_call_operand.vmem [shape: f32[1,128], index: 3, kind: input, shape index: {}]
  %s4 = inlined_call_operand.hbm [shape: f32[8,128], index: 4, kind: output, shape index: {}]
  %s5 = sld [smem:[#allocation0]]
  $region38: #{tpu_custom_call.1} parent=0
    _
  %s7 = ssub.s32 1, %s5
  %s8 = scalar_select 0, %s7, %s5
  $region1: #{tpu_custom_call.1} parent=0
    #allocation2 [shape = 'u8[4096]{0}', space=vmem, size = 0x1000, scoped, tag = 'input window, operand 0, single buffered']
    #allocation3 [shape = 's32[1]{0}', space=sflag, size = 0x4, scoped, tag = 'scoped memory for tpu_custom_call.1']
    #allocation4 [shape = 's32[1]{0}', space=sflag, size = 0x4, scoped, tag = 'scoped memory for tpu_custom_call.1']
    #allocation5 [shape = 'u8[65536]{0}', space=vmem, size = 0x10000, scoped, tag = 'input window, operand 1, single buffered']
    #allocation6 [shape = 's32[1]{0}', space=sflag, size = 0x4, scoped, tag = 'scoped memory for tpu_custom_call.1']
    #allocation7 [shape = 'u8[65536]{0}', space=vmem, size = 0x10000, scoped, tag = 'input window, operand 2, single buffered']
    #allocation8 [shape = 'u8[4096]{0}', space=vmem, size = 0x1000, scoped, tag = 'output window, operand 0, single buffered']
    %9 = vsyncpa [#allocation3], 0
    %10 = vsyncpa [#allocation6], 0
    %11 = vsyncpa [#allocation4], 0
    // Predicated region
    $region2: #{tpu_custom_call.1} parent=1 // pred_check
      _
    $region3: #{tpu_custom_call.1} parent=1 // pred_check_branch
      %13 = sbr.rel (0) target = $region5
    $region4: #{tpu_custom_call.1} parent=1 // pred_region
      %s15 = ssub.s32 128, 128
      %16 = vsyncadd [#allocation3], %s15
      %s18 = sshll.u32 [#allocation2], 4
      %s19 = int_to_ptr.vmem [resolvable:$true] %s18
      %21 = dma.hbm_to_vmem [thread:$0]  %s0, 128, %s19, [#allocation3]
    $region5: #{tpu_custom_call.1} parent=1 // pred_fallthru
      _
    // Predicated region
    $region6: #{tpu_custom_call.1} parent=1 // pred_check
      _
    $region7: #{tpu_custom_call.1} parent=1 // pred_check_branch
      %23 = sbr.rel (0) target = $region9
    $region8: #{tpu_custom_call.1} parent=1 // pred_region
      %s25 = ssub.s32 2048, 2048
      %26 = vsyncadd [#allocation6], %s25
      %s27 = sshll.u32 [#allocation5], 4
      %s28 = int_to_ptr.vmem [resolvable:$true] %s27
      %33 = dma.hbm_to_vmem [thread:$0]  %s1, 2048, %s28, [#allocation6], 128, 128, 8
    $region9: #{tpu_custom_call.1} parent=1 // pred_fallthru
      _
    // Predicated region
    $region10: #{tpu_custom_call.1} parent=1 // pred_check
      _
    $region11: #{tpu_custom_call.1} parent=1 // pred_check_branch
      %35 = sbr.rel (0) target = $region13
    $region12: #{tpu_custom_call.1} parent=1 // pred_region
      %s37 = ssub.s32 2048, 2048
      %38 = vsyncadd [#allocation6], %s37
      %s39 = sshll.u32 [#allocation7], 4
      %s40 = int_to_ptr.vmem [resolvable:$true] %s39
      %45 = dma.hbm_to_vmem [thread:$0]  %s2, 2048, %s40, [#allocation6], 128, 128, 8
    $region13: #{tpu_custom_call.1} parent=1 // pred_fallthru
      _
    // Predicated region
    $region14: #{tpu_custom_call.1} parent=1 // pred_check
      _
    $region15: #{tpu_custom_call.1} parent=1 // pred_check_branch
      %47 = sbr.rel (0) target = $region17
    $region16: #{tpu_custom_call.1} parent=1 // pred_region
      _
    $region17: #{tpu_custom_call.1} parent=1 // pred_fallthru
      _
    // Predicated region
    $region18: #{tpu_custom_call.1} parent=1 // pred_check
      _
    $region19: #{tpu_custom_call.1} parent=1 // pred_check_branch
      %49 = sbr.rel (0) target = $region21
    $region20: #{tpu_custom_call.1} parent=1 // pred_region
      %50 = dma.done [#allocation3], 128
    $region21: #{tpu_custom_call.1} parent=1 // pred_fallthru
      _
    // Predicated region
    $region22: #{tpu_custom_call.1} parent=1 // pred_check
      _
    $region23: #{tpu_custom_call.1} parent=1 // pred_check_branch
      %52 = sbr.rel (0) target = $region25
    $region24: #{tpu_custom_call.1} parent=1 // pred_region
      %53 = dma.done [#allocation6], 2048
    $region25: #{tpu_custom_call.1} parent=1 // pred_fallthru
      _
    // Predicated region
    $region26: #{tpu_custom_call.1} parent=1 // pred_check
      _
    $region27: #{tpu_custom_call.1} parent=1 // pred_check_branch
      %55 = sbr.rel (0) target = $region29
    $region28: #{tpu_custom_call.1} parent=1 // pred_region
      %56 = dma.done [#allocation6], 2048
    $region29: #{tpu_custom_call.1} parent=1 // pred_fallthru
      _
    %v57 = vld [vmem:[#allocation2] sm:$0xff]
    %v58 = vlaneseq
    %v59 = vand.u32 %v58, 127
    %60 = vset.pattern.permute.xlu0 0
    %61 = vperm.xlu0 %60, %v57
    %v62 = vpop.permute.xlu0 %61
    %vm63 = vcmp.eq.s32.totalorder %v62, %v59
    %v64 = vsel %vm63, 1, 0
    %v65 = vcvt.s32.f32 %v64
    %v66 = vadd.f32 %v65, 0.0
    %67 = vset.pattern.permute.xlu0 1
    %68 = vperm.xlu0 %67, %v57
    %v69 = vpop.permute.xlu0 %68
    %vm70 = vcmp.eq.s32.totalorder %v69, %v59
    %v71 = vsel %vm70, 1, 0
    %v72 = vcvt.s32.f32 %v71
    %v73 = vadd.f32 %v66, %v72
    %74 = vset.pattern.permute.xlu0 2
    %75 = vperm.xlu0 %74, %v57
    %v76 = vpop.permute.xlu0 %75
    %vm77 = vcmp.eq.s32.totalorder %v76, %v59
    %v78 = vsel %vm77, 1, 0
    %v79 = vcvt.s32.f32 %v78
    %v80 = vadd.f32 %v73, %v79
    %81 = vset.pattern.permute.xlu0 3
    %82 = vperm.xlu0 %81, %v57
    %v83 = vpop.permute.xlu0 %82
    %vm84 = vcmp.eq.s32.totalorder %v83, %v59
    %v85 = vsel %vm84, 1, 0
    %v86 = vcvt.s32.f32 %v85
    %v87 = vadd.f32 %v80, %v86
    %88 = vset.pattern.permute.xlu0 4
    %89 = vperm.xlu0 %88, %v57
    %v90 = vpop.permute.xlu0 %89
    %vm91 = vcmp.eq.s32.totalorder %v90, %v59
    %v92 = vsel %vm91, 1, 0
    %v93 = vcvt.s32.f32 %v92
    %v94 = vadd.f32 %v87, %v93
    %95 = vset.pattern.permute.xlu0 5
    %96 = vperm.xlu0 %95, %v57
    %v97 = vpop.permute.xlu0 %96
    %vm98 = vcmp.eq.s32.totalorder %v97, %v59
    %v99 = vsel %vm98, 1, 0
    %v100 = vcvt.s32.f32 %v99
    %v101 = vadd.f32 %v94, %v100
    %102 = vset.pattern.permute.xlu0 6
    %103 = vperm.xlu0 %102, %v57
    %v104 = vpop.permute.xlu0 %103
    %vm105 = vcmp.eq.s32.totalorder %v104, %v59
    %v106 = vsel %vm105, 1, 0
    %v107 = vcvt.s32.f32 %v106
    %v108 = vadd.f32 %v101, %v107
    %109 = vset.pattern.permute.xlu0 7
    %110 = vperm.xlu0 %109, %v57
    %v111 = vpop.permute.xlu0 %110
    %vm112 = vcmp.eq.s32.totalorder %v111, %v59
    %v113 = vsel %vm112, 1, 0
    %v114 = vcvt.s32.f32 %v113
    %v115 = vadd.f32 %v108, %v114
    %v116 = vld [vmem:[#allocation5] sm:$0xff]
    %v117 = vld [vmem:[#allocation5 + $0x8] sm:$0xff]
    %v118 = vld [vmem:[#allocation5 + $0x10] sm:$0xff]
    %v119 = vld [vmem:[#allocation5 + $0x18] sm:$0xff]
    %v120 = vld [vmem:[#allocation5 + $0x20] sm:$0xff]
    %v121 = vld [vmem:[#allocation5 + $0x28] sm:$0xff]
    %v122 = vld [vmem:[#allocation5 + $0x30] sm:$0xff]
    %v123 = vld [vmem:[#allocation5 + $0x38] sm:$0xff]
    %v124 = vld [vmem:[#allocation5 + $0x40] sm:$0xff]
    %v125 = vld [vmem:[#allocation5 + $0x48] sm:$0xff]
    %v126 = vld [vmem:[#allocation5 + $0x50] sm:$0xff]
    %v127 = vld [vmem:[#allocation5 + $0x58] sm:$0xff]
    %v128 = vld [vmem:[#allocation5 + $0x60] sm:$0xff]
    %v129 = vld [vmem:[#allocation5 + $0x68] sm:$0xff]
    %v130 = vld [vmem:[#allocation5 + $0x70] sm:$0xff]
    %v131 = vld [vmem:[#allocation5 + $0x78] sm:$0xff]
    %v132 = vld [vmem:[#allocation7] sm:$0xff]
    %v133 = vld [vmem:[#allocation7 + $0x8] sm:$0xff]
    %v134 = vld [vmem:[#allocation7 + $0x10] sm:$0xff]
    %v135 = vld [vmem:[#allocation7 + $0x18] sm:$0xff]
    %v136 = vld [vmem:[#allocation7 + $0x20] sm:$0xff]
    %v137 = vld [vmem:[#allocation7 + $0x28] sm:$0xff]
    %v138 = vld [vmem:[#allocation7 + $0x30] sm:$0xff]
    %v139 = vld [vmem:[#allocation7 + $0x38] sm:$0xff]
    %v140 = vld [vmem:[#allocation7 + $0x40] sm:$0xff]
    %v141 = vld [vmem:[#allocation7 + $0x48] sm:$0xff]
    %v142 = vld [vmem:[#allocation7 + $0x50] sm:$0xff]
    %v143 = vld [vmem:[#allocation7 + $0x58] sm:$0xff]
    %v144 = vld [vmem:[#allocation7 + $0x60] sm:$0xff]
    %v145 = vld [vmem:[#allocation7 + $0x68] sm:$0xff]
    %v146 = vld [vmem:[#allocation7 + $0x70] sm:$0xff]
    %v147 = vld [vmem:[#allocation7 + $0x78] sm:$0xff]
    %148 = vmatprep.subr.mxu0 0.0
    %149 = vmatpush1.msra.mxu0 %v116
    %150 = vmatprep.subr.mxu0 0.0
    %151 = vmatpush1.msra.mxu0 %v117
    %152 = vmatprep.subr.mxu0 0.0
    %153 = vmatpush1.msra.mxu0 %v118
    %154 = vmatprep.subr.mxu0 0.0
    %155 = vmatpush1.msra.mxu0 %v119
    %156 = vmatprep.subr.mxu0 0.0
    %157 = vmatpush1.msra.mxu0 %v120
    %158 = vmatprep.subr.mxu0 0.0
    %159 = vmatpush1.msra.mxu0 %v121
    %160 = vmatprep.subr.mxu0 0.0
    %161 = vmatpush1.msra.mxu0 %v122
    %162 = vmatprep.subr.mxu0 0.0
    %163 = vmatpush1.msra.mxu0 %v123
    %164 = vmatprep.subr.mxu0 0.0
    %165 = vmatpush1.msra.mxu0 %v124
    %166 = vmatprep.subr.mxu0 0.0
    %167 = vmatpush1.msra.mxu0 %v125
    %168 = vmatprep.subr.mxu0 0.0
    %169 = vmatpush1.msra.mxu0 %v126
    %170 = vmatprep.subr.mxu0 0.0
    %171 = vmatpush1.msra.mxu0 %v127
    %172 = vmatprep.subr.mxu0 0.0
    %173 = vmatpush1.msra.mxu0 %v128
    %174 = vmatprep.subr.mxu0 0.0
    %175 = vmatpush1.msra.mxu0 %v129
    %176 = vmatprep.subr.mxu0 0.0
    %177 = vmatpush1.msra.mxu0 %v130
    %178 = vmatprep.subr.mxu0 0.0
    %179 = vmatpush1.msra.mxu0 %v131
    %180 = vmatprep.subr.mxu0 0.0
    %181 = vmatpush1.msra.mxu0 0.0
    %182 = vmatprep.subr.mxu0 0.0
    %183 = vmatpush1.msra.mxu0 0.0
    %184 = vmatprep.subr.mxu0 0.0
    %185 = vmatpush1.msra.mxu0 0.0
    %186 = vmatprep.subr.mxu0 0.0
    %187 = vmatpush1.msra.mxu0 0.0
    %188 = vmatprep.subr.mxu0 0.0
    %189 = vmatpush1.msra.mxu0 0.0
    %190 = vmatprep.subr.mxu0 0.0
    %191 = vmatpush1.msra.mxu0 0.0
    %192 = vmatprep.subr.mxu0 0.0
    %193 = vmatpush1.msra.mxu0 0.0
    %194 = vmatprep.subr.mxu0 0.0
    %195 = vmatpush1.msra.mxu0 0.0
    %196 = vmatprep.subr.mxu0 0.0
    %197 = vmatpush1.msra.mxu0 0.0
    %198 = vmatprep.subr.mxu0 0.0
    %199 = vmatpush1.msra.mxu0 0.0
    %200 = vmatprep.subr.mxu0 0.0
    %201 = vmatpush1.msra.mxu0 0.0
    %202 = vmatprep.subr.mxu0 0.0
    %203 = vmatpush1.msra.mxu0 0.0
    %204 = vmatprep.subr.mxu0 0.0
    %205 = vmatpush1.msra.mxu0 0.0
    %206 = vmatprep.subr.mxu0 0.0
    %207 = vmatpush1.msra.mxu0 0.0
    %208 = vmatprep.subr.mxu0 0.0
    %209 = vmatpush1.msra.mxu0 0.0
    %210 = vmatprep.subr.mxu0 0.0
    %211 = vmatpush1.msra.mxu0 0.0
    %212 = vmatprep.mubr.f32.mxu0 0.0
    %213 = vmatmul.mubr.f32.gmra.mrb[0].mxu0 %v115
    %v214 = vpop.f32.mrb[0].mxu0
    %v215 = vadd.f32 0.0, %v214
    %v216 = vpop.f32.mrb[0].mxu0
    %217 = vdwg.mxu0
    %v218 = vmul.f32 %v215, 0.125
    %v219 = vld [vmem:[%s3] sm:$0x1]
    %v221 = vlaneseq
    %v222 = vshrl.u32 %v221, 7
    %v223 = vsub.s32 0, %v222
    %v224 = vrot.slane %v219, %v223
    %226 = vmatprep.subr.mxu0 0.0
    %227 = vmatpush1.msra.mxu0 %v132
    %228 = vmatprep.subr.mxu0 0.0
    %229 = vmatpush1.msra.mxu0 %v133
    %230 = vmatprep.subr.mxu0 0.0
    %231 = vmatpush1.msra.mxu0 %v134
    %232 = vmatprep.subr.mxu0 0.0
    %233 = vmatpush1.msra.mxu0 %v135
    %234 = vmatprep.subr.mxu0 0.0
    %235 = vmatpush1.msra.mxu0 %v136
    %236 = vmatprep.subr.mxu0 0.0
    %237 = vmatpush1.msra.mxu0 %v137
    %238 = vmatprep.subr.mxu0 0.0
    %239 = vmatpush1.msra.mxu0 %v138
    %240 = vmatprep.subr.mxu0 0.0
    %241 = vmatpush1.msra.mxu0 %v139
    %242 = vmatprep.subr.mxu0 0.0
    %243 = vmatpush1.msra.mxu0 %v140
    %244 = vmatprep.subr.mxu0 0.0
    %245 = vmatpush1.msra.mxu0 %v141
    %246 = vmatprep.subr.mxu0 0.0
    %247 = vmatpush1.msra.mxu0 %v142
    %248 = vmatprep.subr.mxu0 0.0
    %249 = vmatpush1.msra.mxu0 %v143
    %250 = vmatprep.subr.mxu0 0.0
    %251 = vmatpush1.msra.mxu0 %v144
    %252 = vmatprep.subr.mxu0 0.0
    %253 = vmatpush1.msra.mxu0 %v145
    %254 = vmatprep.subr.mxu0 0.0
    %255 = vmatpush1.msra.mxu0 %v146
    %256 = vmatprep.subr.mxu0 0.0
    %257 = vmatpush1.msra.mxu0 %v147
    %258 = vmatprep.subr.mxu0 0.0
    %259 = vmatpush1.msra.mxu0 0.0
    %260 = vmatprep.subr.mxu0 0.0
    %261 = vmatpush1.msra.mxu0 0.0
    %262 = vmatprep.subr.mxu0 0.0
    %263 = vmatpush1.msra.mxu0 0.0
    %264 = vmatprep.subr.mxu0 0.0
    %265 = vmatpush1.msra.mxu0 0.0
    %266 = vmatprep.subr.mxu0 0.0
    %267 = vmatpush1.msra.mxu0 0.0
    %268 = vmatprep.subr.mxu0 0.0
    %269 = vmatpush1.msra.mxu0 0.0
    %270 = vmatprep.subr.mxu0 0.0
    %271 = vmatpush1.msra.mxu0 0.0
    %272 = vmatprep.subr.mxu0 0.0
    %273 = vmatpush1.msra.mxu0 0.0
    %274 = vmatprep.subr.mxu0 0.0
    %275 = vmatpush1.msra.mxu0 0.0
    %276 = vmatprep.subr.mxu0 0.0
    %277 = vmatpush1.msra.mxu0 0.0
    %278 = vmatprep.subr.mxu0 0.0
    %279 = vmatpush1.msra.mxu0 0.0
    %280 = vmatprep.subr.mxu0 0.0
    %281 = vmatpush1.msra.mxu0 0.0
    %282 = vmatprep.subr.mxu0 0.0
    %283 = vmatpush1.msra.mxu0 0.0
    %284 = vmatprep.subr.mxu0 0.0
    %285 = vmatpush1.msra.mxu0 0.0
    %286 = vmatprep.subr.mxu0 0.0
    %287 = vmatpush1.msra.mxu0 0.0
    %288 = vmatprep.subr.mxu0 0.0
    %289 = vmatpush1.msra.mxu0 0.0
    %290 = vmatprep.mubr.f32.mxu0 0.0
    %291 = vmatmul.mubr.f32.gmra.mrb[0].mxu0 %v218
    %v292 = vpop.f32.mrb[0].mxu0
    %v293 = vadd.f32 %v224, %v292
    %v294 = vpop.f32.mrb[0].mxu0
    %295 = vdwg.mxu0
    %296 = vst [vmem:[#allocation8] sm:$0xff] %v293
    // Predicated region
    $region30: #{tpu_custom_call.1} parent=1 // pred_check
      _
    $region31: #{tpu_custom_call.1} parent=1 // pred_check_branch
      %298 = sbr.rel (0) target = $region33
    $region32: #{tpu_custom_call.1} parent=1 // pred_region
      %s300 = ssub.s32 128, 128
      %301 = vsyncadd [#allocation4], %s300
      %s303 = sshll.u32 [#allocation8], 4
      %s304 = int_to_ptr.vmem [resolvable:$true] %s303
      %306 = dma.vmem_to_hbm [thread:$0]  %s304, 128, %s4, [#allocation4]
    $region33: #{tpu_custom_call.1} parent=1 // pred_fallthru
      _
    // Predicated region
    $region34: #{tpu_custom_call.1} parent=1 // pred_check
      _
    $region35: #{tpu_custom_call.1} parent=1 // pred_check_branch
      %308 = sbr.rel (0) target = $region37
    $region36: #{tpu_custom_call.1} parent=1 // pred_region
      %309 = dma.done [#allocation4], 128
    $region37: #{tpu_custom_call.1} parent=1 // pred_fallthru
      _
    %310 = vsyncpa [#allocation3], 1
    %311 = vsyncpa [#allocation6], 1
    %312 = vsyncpa [#allocation4], 1

</llo_original>
